<compile_context>
chip_gen: v6e
topology: v6e:2x2x1
jax: 0.10.0
libtpu: 0.0.40
codegen_flags: <defaults>
</compile_context>

<pallas_src>
import functools

import jax
import jax.numpy as jnp
from jax import lax
from jax.experimental import pallas as pl
from jax.experimental.pallas import tpu as pltpu


_VMEM_BUDGET = 16 * 1024 * 1024        # resident-block budget (limit is 2x this)
_TARGET_LOGIT_BYTES = 2 * 1024 * 1024  # logit bytes per grid step we aim for
_MAX_SAMPLES_PER_BLOCK = 64            # bound on static per-sample unrolling


# ----------------------------------------------------------------------------
# N-D (channels-first) path
# ----------------------------------------------------------------------------
def _ce_nd_kernel(x_ref, t_ref, o_ref, *, hw, njc, needs_mask):
    """Accumulate per-pixel NLL of one (bn, C, TL) logits tile into o_ref."""
    p = pl.program_id(1)           # parallel pixel-chunk index
    j = pl.program_id(2)           # pixel-tile index inside the chunk (reduction)
    bn, c, tl = x_ref.shape

    @pl.when(j == 0)
    def _():
        o_ref[...] = jnp.zeros_like(o_ref)

    # Class-index iota on the sublane axis, shared by all samples in the block.
    cls = lax.broadcasted_iota(jnp.int32, (c, tl), 0)

    def sample_nll(b):
        # Classes on sublanes, pixels on lanes -> lane-dense math at small C.
        x = x_ref[b].astype(jnp.float32)                  # (C, TL)
        t = t_ref[b]                                      # (1, TL) int32
        m = jnp.max(x, axis=0, keepdims=True)             # (1, TL)
        xs = x - m                                        # reuse (x - m); x retires
        s = jnp.sum(jnp.exp(xs), axis=0, keepdims=True)   # (1, TL)
        tgt = jnp.sum(jnp.where(cls == t, xs, 0.0), axis=0, keepdims=True)
        # lse - x_t == log(sum exp(x - m)) - (x_t - m)
        return jnp.log(s) - tgt                           # (1, TL)

    if needs_mask:
        g = p * njc + j                                   # global pixel-tile index
        in_bounds = (g + 1) * tl <= hw

        @pl.when(in_bounds)                               # interior tiles: no mask cost
        def _():
            for b in range(bn):
                o_ref[b] += sample_nll(b)

        @pl.when(jnp.logical_not(in_bounds))              # boundary / clamped tile
        def _():
            lane = lax.broadcasted_iota(jnp.int32, (1, tl), 1)
            valid = g * tl + lane < hw
            for b in range(bn):
                o_ref[b] += jnp.where(valid, sample_nll(b), 0.0)
    else:
        for b in range(bn):
            o_ref[b] += sample_nll(b)


def _choose_tiles(n, c, hw, itemsize):
    """Pick (samples-per-block bn, pixel-lanes-per-block tl).

    Dtype-aware: aims for ~2 MiB of logit bytes per grid step (amortizing the
    ~0.35us per-step pipeline overhead) while keeping the double-buffered
    working set - including the sublane-padded int32 target and f32 output
    buffers - inside _VMEM_BUDGET on every TPU generation.
    """
    sub_pack = max(1, 32 // itemsize)          # sublane packing: f32->8, bf16->16
    c_pad = -(-c // sub_pack) * sub_pack       # in-VMEM padded class rows
    # Resident bytes per (sample, lane) column:
    #   2 logit buffers + 2 int32 target buffers + 2 f32 output buffers
    #   (the latter two sublane-padded from 1 row to 8).
    per_lane = 2 * c_pad * itemsize + 2 * 8 * 4 + 2 * 8 * 4
    bn_tl = max(128, min(_VMEM_BUDGET // per_lane,
                         _TARGET_LOGIT_BYTES // max(1, c * itemsize)))
    if hw <= bn_tl:
        tl = hw                                # full spatial extent (block rule)
        bn = max(1, min(n, _MAX_SAMPLES_PER_BLOCK, bn_tl // max(1, hw)))
    else:
        tl = max(128, (bn_tl // 128) * 128)    # lane-dense multiple of 128
        bn = 1
    return bn, tl


def _loss_nd(x, t, nbclasses):
    n, c = x.shape[0], x.shape[1]
    hw = 1
    for d in x.shape[2:]:
        hw *= d
    # Zero-copy NCHW -> (N, C, H*W); pixel order matches PyTorch's flatten.
    x3 = x.reshape(n, c, hw)
    t3 = t.reshape(n, 1, hw).astype(jnp.int32)

    bn, tl = _choose_tiles(n, c, hw, x.dtype.itemsize)
    ni = pl.cdiv(n, bn)
    nj = pl.cdiv(hw, tl)
    # v7x megacore: if there is only one sample block, split the pixel axis
    # into two parallel chunks so both TensorCores get work.  On single-core
    # parts (v5e/v6e) the extra axis just iterates serially at negligible cost.
    p_split = 2 if (ni == 1 and nj >= 4) else 1
    njc = pl.cdiv(nj, p_split)
    needs_mask = (p_split * njc * tl) != hw

    if p_split * njc == nj:
        def pix(i, p, j):
            return p * njc + j
    else:
        # The last parallel chunk owns one tile index past the real extent;
        # clamp its DMA to the last real tile (its contribution is masked out).
        def pix(i, p, j):
            return jnp.minimum(p * njc + j, nj - 1)

    kernel = functools.partial(_ce_nd_kernel, hw=hw, njc=njc,
                               needs_mask=needs_mask)

    partials = pl.pallas_call(
        kernel,
        out_shape=jax.ShapeDtypeStruct((ni * p_split, bn, 1, tl), jnp.float32),
        grid_spec=pltpu.PrefetchScalarGridSpec(
            num_scalar_prefetch=0,
            grid=(ni, p_split, njc),
            in_specs=[
                # logits: (bn, C, TL) tile per (sample-block, pixel-tile)
                pl.BlockSpec((bn, c, tl), lambda i, p, j: (i, 0, pix(i, p, j))),
                # targets: lane-dense (bn, 1, TL) int32 rows
                pl.BlockSpec((bn, 1, tl), lambda i, p, j: (i, 0, pix(i, p, j))),
            ],
            # One resident (bn, 1, TL) partial-sum block per (sample-block,
            # pixel-chunk); accumulated across the j (reduction) axis.
            out_specs=pl.BlockSpec((None, bn, 1, tl),
                                   lambda i, p, j: (i * p_split + p, 0, 0, 0)),
        ),
        compiler_params=pltpu.CompilerParams(
            dimension_semantics=("parallel", "parallel", "arbitrary"),
            vmem_limit_bytes=2 * _VMEM_BUDGET),
    )(x3, t3)

    # Tiny final reduction in plain JAX: drop padded sample rows, sum, mean.
    p4 = partials.reshape(ni, p_split, bn, tl)
    p4 = jnp.swapaxes(p4, 1, 2).reshape(ni * bn, p_split * tl)
    return jnp.sum(p4[:n]) / (n * hw)


# ----------------------------------------------------------------------------
# 2-D (rows x classes) path
# ----------------------------------------------------------------------------
def _ce_2d_kernel(x_ref, t_ref, o_ref):
    """Row-major (BR, C) logits -> per-row NLL (BR, 1); classes on lanes."""
    x = x_ref[...].astype(jnp.float32)                        # (BR, C)
    t = t_ref[...]                                            # (BR, 1) int32
    m = jnp.max(x, axis=1, keepdims=True)                     # (BR, 1)
    xs = x - m
    s = jnp.sum(jnp.exp(xs), axis=1, keepdims=True)           # (BR, 1)
    cls = lax.broadcasted_iota(jnp.int32, x.shape, 1)         # (BR, C)
    tgt = jnp.sum(jnp.where(cls == t, xs, 0.0), axis=1, keepdims=True)
    o_ref[...] = jnp.log(s) - tgt                             # lse - x_t


def _choose_rows_2d(rows, c, itemsize):
    """Row-block size for the 2-D path ((BR, C) buffers are lane-padded to 128)."""
    c_lane = -(-c // 128) * 128
    per_row = 2 * c_lane * itemsize + 4 * 128 * 4   # x buffers + padded t/out buffers
    br = min(8192, _VMEM_BUDGET // per_row)
    br = max(8, (br // 8) * 8)
    if rows <= br:
        return rows, 1
    return br, pl.cdiv(rows, br)


def _loss_2d(x, t, nbclasses):
    # Read (rows, C) row-major - no wrapper-side transpose / extra HBM pass.
    # The per-row output is tiny, so narrow (BR, 1) stores don't matter.
    rows, c = x.shape
    br, nr = _choose_rows_2d(rows, c, x.dtype.itemsize)
    t2 = t.reshape(rows, 1).astype(jnp.int32)

    nll = pl.pallas_call(
        _ce_2d_kernel,
        out_shape=jax.ShapeDtypeStruct((nr * br, 1), jnp.float32),
        grid_spec=pltpu.PrefetchScalarGridSpec(
            num_scalar_prefetch=0,
            grid=(nr,),
            in_specs=[
                pl.BlockSpec((br, c), lambda i: (i, 0)),
                pl.BlockSpec((br, 1), lambda i: (i, 0)),
            ],
            out_specs=pl.BlockSpec((br, 1), lambda i: (i, 0)),
        ),
        compiler_params=pltpu.CompilerParams(
            dimension_semantics=("parallel",),
            vmem_limit_bytes=2 * _VMEM_BUDGET),
    )(x, t2)

    # Rows past `rows` (boundary-block padding) hold garbage - drop them.
    return jnp.sum(nll[:rows]) / rows


# ----------------------------------------------------------------------------
# Public entry point + reference
# ----------------------------------------------------------------------------
def softmax_cross_entropy_loss(inputs, target, nbclasses, weight=None):
    """Equivalent of MySoftmaxCrossEntropyLoss(nbclasses, weight)(inputs, target)."""
    if weight is not None:
        # TODO(synk): per-class weights (module default is None) not implemented.
        raise NotImplementedError("per-class weight is not supported")
    if inputs.ndim > 2:
        assert inputs.shape[1] == nbclasses
        return _loss_nd(inputs, target, nbclasses)
    assert inputs.shape[-1] == nbclasses
    return _loss_2d(inputs, target, nbclasses)


def _reference_loss(inputs, target, nbclasses):
    if inputs.ndim > 2:
        n, c = inputs.shape[0], inputs.shape[1]
        x2d = jnp.moveaxis(inputs.reshape(n, c, -1), 1, 2).reshape(-1, c)
    else:
        x2d = inputs
    x2d = x2d.astype(jnp.float32)
    t = target.reshape(-1).astype(jnp.int32)
    logp = jax.nn.log_softmax(x2d, axis=-1)
    nll = -jnp.take_along_axis(logp, t[:, None], axis=-1)[:, 0]
    return jnp.mean(nll)


if __name__ == "__main__":
    root = jax.random.PRNGKey(0)

    def run_case(key, shape, nbclasses, dtype=jnp.float32):
        k1, k2 = jax.random.split(key)
        x = jax.random.normal(k1, shape, dtype=jnp.float32).astype(dtype)
        t_shape = (shape[0],) + tuple(shape[2:]) if len(shape) > 2 else (shape[0],)
        t = jax.random.randint(k2, t_shape, 0, nbclasses, dtype=jnp.int32)
        got = jax.block_until_ready(softmax_cross_entropy_loss(x, t, nbclasses))
        want = jax.block_until_ready(_reference_loss(x, t, nbclasses))
        assert jnp.allclose(got, want, rtol=1e-4, atol=1e-5), (shape, dtype, got, want)

    keys = jax.random.split(root, 5)
    # Primary case (baidu segmentation convention: nbclasses = 8, NCHW).
    run_case(keys[0], (2, 8, 16, 16), 8)
    # bf16 logits: DMA'd as bf16, upcast in-kernel.
    run_case(keys[1], (2, 8, 16, 16), 8, dtype=jnp.bfloat16)
    # Sample batching with a padded last sample block (18 samples, bn = 16).
    run_case(keys[2], (18, 8, 64, 64), 8)
    # Single sample, many classes: pixel tiling, boundary-lane mask, and the
    # 2-way parallel pixel-chunk split (v7x megacore path).
    run_case(keys[3], (1, 256, 96, 96), 256)
    # 2-D path (rows x classes), multiple row blocks with a padded boundary.
    run_case(keys[4], (10000, 8), 8)

    print("KERNEL_OK")
</pallas_src>

<mosaic_0001>
module attributes {stable_mosaic.version = 11 : i64} {
  func.func @_ce_nd_kernel(%arg0: i32, %arg1: i32, %arg2: i32, %arg3: memref<2x8x256xf32, #tpu.memory_space<vmem>>, %arg4: memref<2x1x256xi32, #tpu.memory_space<vmem>>, %arg5: memref<1x2x1x256xf32, #tpu.memory_space<vmem>>) attributes {dimension_semantics = [#tpu.dimension_semantics<parallel>, #tpu.dimension_semantics<parallel>, #tpu.dimension_semantics<arbitrary>], iteration_bounds = array<i64: 1, 1, 1>, scalar_prefetch = 0 : i64, scratch_operands = 0 : i64, tpu.core_type = #tpu.core_type<tc>, window_params = [{transform_indices = @transform_0, window_bounds = array<i64: 2, 8, 256>}, {transform_indices = @transform_1, window_bounds = array<i64: 2, 1, 256>}, {transform_indices = @transform_2, window_bounds = array<i64: 1, 2, 1, 256>}]} {
    %c0_i32 = arith.constant 0 : i32
    %0 = arith.cmpi eq, %arg2, %c0_i32 : i32
    %1 = arith.extui %0 : i1 to i32
    %c0_i32_0 = arith.constant 0 : i32
    %2 = arith.cmpi ne, %1, %c0_i32_0 : i32
    scf.if %2 {
      %cst_34 = arith.constant 0.000000e+00 : f32
      %54 = vector.broadcast %cst_34 : f32 to vector<2x1x256xf32>
      %c0_35 = arith.constant 0 : index
      %c0_36 = arith.constant 0 : index
      %c0_37 = arith.constant 0 : index
      %c0_38 = arith.constant 0 : index
      %55 = vector.load %arg5[%c0_35, %c0_36, %c0_37, %c0_38] : memref<1x2x1x256xf32, #tpu.memory_space<vmem>>, vector<1x2x1x256xf32>
      %56 = vector.shape_cast %55 : vector<1x2x1x256xf32> to vector<2x1x256xf32>
      %57 = vector.shape_cast %54 : vector<2x1x256xf32> to vector<1x2x1x256xf32>
      tpu.vector_store %arg5[%c0_35, %c0_36, %c0_37, %c0_38], %57 {strides = array<i32>} : memref<1x2x1x256xf32, #tpu.memory_space<vmem>>, vector<1x2x1x256xf32>,
    } else {
    }
    %3 = tpu.iota {dimensions = array<i32: 0>} : vector<8x256xi32>
    %c0 = arith.constant 0 : index
    %c0_1 = arith.constant 0 : index
    %c0_2 = arith.constant 0 : index
    %c0_3 = arith.constant 0 : index
    %4 = vector.load %arg5[%c0, %c0_1, %c0_2, %c0_3] : memref<1x2x1x256xf32, #tpu.memory_space<vmem>>, vector<1x1x1x256xf32>
    %5 = vector.shape_cast %4 : vector<1x1x1x256xf32> to vector<1x256xf32>
    %c0_4 = arith.constant 0 : index
    %c0_5 = arith.constant 0 : index
    %c0_6 = arith.constant 0 : index
    %6 = vector.load %arg3[%c0_4, %c0_5, %c0_6] : memref<2x8x256xf32, #tpu.memory_space<vmem>>, vector<1x8x256xf32>
    %7 = vector.shape_cast %6 : vector<1x8x256xf32> to vector<8x256xf32>
    %c0_7 = arith.constant 0 : index
    %c0_8 = arith.constant 0 : index
    %c0_9 = arith.constant 0 : index
    %8 = vector.load %arg4[%c0_7, %c0_8, %c0_9] : memref<2x1x256xi32, #tpu.memory_space<vmem>>, vector<1x1x256xi32>
    %9 = vector.shape_cast %8 : vector<1x1x256xi32> to vector<1x256xi32>
    %cst = arith.constant dense<0xFF800000> : vector<256xf32>
    %10 = vector.multi_reduction <maximumf>, %7, %cst [0] : vector<8x256xf32> to vector<256xf32>
    %11 = vector.shape_cast %10 : vector<256xf32> to vector<1x256xf32>
    %12 = vector.broadcast %11 : vector<1x256xf32> to vector<8x256xf32>
    %13 = arith.subf %7, %12 : vector<8x256xf32>
    %14 = math.exp %13 : vector<8x256xf32>
    %cst_10 = arith.constant dense<0.000000e+00> : vector<256xf32>
    %15 = vector.multi_reduction <add>, %14, %cst_10 [0] : vector<8x256xf32> to vector<256xf32>
    %16 = vector.shape_cast %15 : vector<256xf32> to vector<1x256xf32>
    %17 = vector.broadcast %9 : vector<1x256xi32> to vector<8x256xi32>
    %18 = arith.cmpi eq, %3, %17 : vector<8x256xi32>
    %cst_11 = arith.constant 0.000000e+00 : f32
    %19 = vector.broadcast %cst_11 : f32 to vector<8x256xf32>
    %20 = arith.select %18, %13, %19 : vector<8x256xi1>, vector<8x256xf32>
    %cst_12 = arith.constant dense<0.000000e+00> : vector<256xf32>
    %21 = vector.multi_reduction <add>, %20, %cst_12 [0] : vector<8x256xf32> to vector<256xf32>
    %22 = vector.shape_cast %21 : vector<256xf32> to vector<1x256xf32>
    %23 = math.log %16 : vector<1x256xf32>
    %24 = arith.subf %23, %22 : vector<1x256xf32>
    %25 = arith.addf %5, %24 : vector<1x256xf32>
    %c0_13 = arith.constant 0 : index
    %c0_14 = arith.constant 0 : index
    %c0_15 = arith.constant 0 : index
    %c0_16 = arith.constant 0 : index
    %26 = vector.load %arg5[%c0_13, %c0_14, %c0_15, %c0_16] : memref<1x2x1x256xf32, #tpu.memory_space<vmem>>, vector<1x1x1x256xf32>
    %27 = vector.shape_cast %26 : vector<1x1x1x256xf32> to vector<1x256xf32>
    %28 = vector.shape_cast %25 : vector<1x256xf32> to vector<1x1x1x256xf32>
    tpu.vector_store %arg5[%c0_13, %c0_14, %c0_15, %c0_16], %28 {strides = array<i32>} : memref<1x2x1x256xf32, #tpu.memory_space<vmem>>, vector<1x1x1x256xf32>,
    %c0_17 = arith.constant 0 : index
    %c1 = arith.constant 1 : index
    %c0_18 = arith.constant 0 : index
    %c0_19 = arith.constant 0 : index
    %29 = vector.load %arg5[%c0_17, %c1, %c0_18, %c0_19] : memref<1x2x1x256xf32, #tpu.memory_space<vmem>>, vector<1x1x1x256xf32>
    %30 = vector.shape_cast %29 : vector<1x1x1x256xf32> to vector<1x256xf32>
    %c1_20 = arith.constant 1 : index
    %c0_21 = arith.constant 0 : index
    %c0_22 = arith.constant 0 : index
    %31 = vector.load %arg3[%c1_20, %c0_21, %c0_22] : memref<2x8x256xf32, #tpu.memory_space<vmem>>, vector<1x8x256xf32>
    %32 = vector.shape_cast %31 : vector<1x8x256xf32> to vector<8x256xf32>
    %c1_23 = arith.constant 1 : index
    %c0_24 = arith.constant 0 : index
    %c0_25 = arith.constant 0 : index
    %33 = vector.load %arg4[%c1_23, %c0_24, %c0_25] : memref<2x1x256xi32, #tpu.memory_space<vmem>>, vector<1x1x256xi32>
    %34 = vector.shape_cast %33 : vector<1x1x256xi32> to vector<1x256xi32>
    %cst_26 = arith.constant dense<0xFF800000> : vector<256xf32>
    %35 = vector.multi_reduction <maximumf>, %32, %cst_26 [0] : vector<8x256xf32> to vector<256xf32>
    %36 = vector.shape_cast %35 : vector<256xf32> to vector<1x256xf32>
    %37 = vector.broadcast %36 : vector<1x256xf32> to vector<8x256xf32>
    %38 = arith.subf %32, %37 : vector<8x256xf32>
    %39 = math.exp %38 : vector<8x256xf32>
    %cst_27 = arith.constant dense<0.000000e+00> : vector<256xf32>
    %40 = vector.multi_reduction <add>, %39, %cst_27 [0] : vector<8x256xf32> to vector<256xf32>
    %41 = vector.shape_cast %40 : vector<256xf32> to vector<1x256xf32>
    %42 = vector.broadcast %34 : vector<1x256xi32> to vector<8x256xi32>
    %43 = arith.cmpi eq, %3, %42 : vector<8x256xi32>
    %cst_28 = arith.constant 0.000000e+00 : f32
    %44 = vector.broadcast %cst_28 : f32 to vector<8x256xf32>
    %45 = arith.select %43, %38, %44 : vector<8x256xi1>, vector<8x256xf32>
    %cst_29 = arith.constant dense<0.000000e+00> : vector<256xf32>
    %46 = vector.multi_reduction <add>, %45, %cst_29 [0] : vector<8x256xf32> to vector<256xf32>
    %47 = vector.shape_cast %46 : vector<256xf32> to vector<1x256xf32>
    %48 = math.log %41 : vector<1x256xf32>
    %49 = arith.subf %48, %47 : vector<1x256xf32>
    %50 = arith.addf %30, %49 : vector<1x256xf32>
    %c0_30 = arith.constant 0 : index
    %c1_31 = arith.constant 1 : index
    %c0_32 = arith.constant 0 : index
    %c0_33 = arith.constant 0 : index
    %51 = vector.load %arg5[%c0_30, %c1_31, %c0_32, %c0_33] : memref<1x2x1x256xf32, #tpu.memory_space<vmem>>, vector<1x1x1x256xf32>
    %52 = vector.shape_cast %51 : vector<1x1x1x256xf32> to vector<1x256xf32>
    %53 = vector.shape_cast %50 : vector<1x256xf32> to vector<1x1x1x256xf32>
    tpu.vector_store %arg5[%c0_30, %c1_31, %c0_32, %c0_33], %53 {strides = array<i32>} : memref<1x2x1x256xf32, #tpu.memory_space<vmem>>, vector<1x1x1x256xf32>,
    return
  }
  func.func @transform_0(%arg0: i32, %arg1: i32, %arg2: i32) -> (i32, i32, i32) {
    %c1_i32 = arith.constant 1 : i32
    %0 = arith.muli %arg1, %c1_i32 : i32
    %1 = arith.addi %0, %arg2 : i32
    %c0_i32 = arith.constant 0 : i32
    %c0_i32_0 = arith.constant 0 : i32
    return %arg0, %c0_i32, %1 : i32, i32, i32
  }
  func.func @transform_1(%arg0: i32, %arg1: i32, %arg2: i32) -> (i32, i32, i32) {
    %c1_i32 = arith.constant 1 : i32
    %0 = arith.muli %arg1, %c1_i32 : i32
    %1 = arith.addi %0, %arg2 : i32
    %c0_i32 = arith.constant 0 : i32
    %c0_i32_0 = arith.constant 0 : i32
    return %arg0, %c0_i32, %1 : i32, i32, i32
  }
  func.func @transform_2(%arg0: i32, %arg1: i32, %arg2: i32) -> (i32, i32, i32, i32) {
    %c1_i32 = arith.constant 1 : i32
    %0 = arith.muli %arg0, %c1_i32 : i32
    %1 = arith.addi %0, %arg1 : i32
    %c0_i32 = arith.constant 0 : i32
    %c0_i32_0 = arith.constant 0 : i32
    %c0_i32_1 = arith.constant 0 : i32
    %c0_i32_2 = arith.constant 0 : i32
    return %1, %c0_i32, %c0_i32_0, %c0_i32_1 : i32, i32, i32, i32
  }
}

</mosaic_0001>

<llo_original>
// kernel: tpu_custom_call.1
$region0: #{tpu_custom_call.1}
  #allocation0 [shape = 'u32[]', space=smem, size = 0x4, offset = 0x4, fixed_abs, tag = 'smem constant byte address 0x4 - core index']
  #allocation1 [shape = 'u32[144,128]{1,0:T(1,128)}', space=vmem, size = 0x12000, scoped, tag = 'internal scratch']
  %s0 = inlined_call_operand.hbm [shape: f32[2,8,256], index: 0, kind: input, shape index: {}]
  %s1 = inlined_call_operand.hbm [shape: s32[2,1,256], index: 1, kind: input, shape index: {}]
  %s2 = inlined_call_operand.hbm [shape: f32[1,2,1,256], index: 2, kind: output, shape index: {}]
  %s3 = sld [smem:[#allocation0]]
  $region30: #{tpu_custom_call.1} parent=0
    _
  %s5 = ssub.s32 1, %s3
  %s6 = scalar_select 0, %s5, %s3
  $region1: #{tpu_custom_call.1} parent=0
    #allocation2 [shape = 'u8[16384]{0}', space=vmem, size = 0x4000, scoped, tag = 'input window, operand 0, single buffered']
    #allocation3 [shape = 's32[1]{0}', space=sflag, size = 0x4, scoped, tag = 'scoped memory for tpu_custom_call.1']
    #allocation4 [shape = 's32[1]{0}', space=sflag, size = 0x4, scoped, tag = 'scoped memory for tpu_custom_call.1']
    #allocation5 [shape = 'u8[2048]{0}', space=vmem, size = 0x800, scoped, tag = 'input window, operand 1, single buffered']
    #allocation6 [shape = 's32[1]{0}', space=sflag, size = 0x4, scoped, tag = 'scoped memory for tpu_custom_call.1']
    #allocation7 [shape = 'u8[2048]{0}', space=vmem, size = 0x800, scoped, tag = 'output window, operand 0, single buffered']
    %7 = vsyncpa [#allocation3], 0
    %8 = vsyncpa [#allocation6], 0
    %9 = vsyncpa [#allocation4], 0
    // Predicated region
    $region2: #{tpu_custom_call.1} parent=1 // pred_check
      _
    $region3: #{tpu_custom_call.1} parent=1 // pred_check_branch
      %11 = sbr.rel (0) target = $region5
    $region4: #{tpu_custom_call.1} parent=1 // pred_region
      %s12 = sadd.s32 0, 0
      %s13 = smul.u32 2, %s12
      %s15 = ssub.s32 512, 512
      %16 = vsyncadd [#allocation3], %s15
      %s17 = smul.addr %s13, 128
      %s18 = scalar_lea.hbm %s0, %s17
      %s19 = sshll.u32 [#allocation2], 4
      %s20 = int_to_ptr.vmem [resolvable:$true] %s19
      %25 = dma.hbm_to_vmem [thread:$0]  %s18, 512, %s20, [#allocation3], 256, 256, 16
    $region5: #{tpu_custom_call.1} parent=1 // pred_fallthru
      _
    // Predicated region
    $region6: #{tpu_custom_call.1} parent=1 // pred_check
      _
    $region7: #{tpu_custom_call.1} parent=1 // pred_check_branch
      %27 = sbr.rel (0) target = $region9
    $region8: #{tpu_custom_call.1} parent=1 // pred_region
      %s28 = sadd.s32 0, 0
      %s29 = smul.u32 2, %s28
      %s31 = ssub.s32 64, 64
      %32 = vsyncadd [#allocation6], %s31
      %s33 = smul.addr %s29, 16
      %s34 = scalar_lea.hbm %s1, %s33
      %s35 = sshll.u32 [#allocation5], 4
      %s36 = int_to_ptr.vmem [resolvable:$true] %s35
      %41 = dma.hbm_to_vmem [thread:$0]  %s34, 64, %s36, [#allocation6], 32, 32, 2
    $region9: #{tpu_custom_call.1} parent=1 // pred_fallthru
      _
    // Predicated region
    $region10: #{tpu_custom_call.1} parent=1 // pred_check
      _
    $region11: #{tpu_custom_call.1} parent=1 // pred_check_branch
      %43 = sbr.rel (0) target = $region13
    $region12: #{tpu_custom_call.1} parent=1 // pred_region
      %44 = dma.done [#allocation3], 512
    $region13: #{tpu_custom_call.1} parent=1 // pred_fallthru
      _
    // Predicated region
    $region14: #{tpu_custom_call.1} parent=1 // pred_check
      _
    $region15: #{tpu_custom_call.1} parent=1 // pred_check_branch
      %46 = sbr.rel (0) target = $region17
    $region16: #{tpu_custom_call.1} parent=1 // pred_region
      %47 = dma.done [#allocation6], 64
    $region17: #{tpu_custom_call.1} parent=1 // pred_fallthru
      _
    %s48 = sadd.s32 0, 0
    %s49 = smul.u32 2, %s48
    %s50 = sadd.s32 0, 0
    %s51 = smul.u32 2, %s50
    %s52 = sadd.s32 0, 0
    %p53 = scmp.eq.s32.totalorder 0, 0
    // Predicated region
    $region18: #{tpu_custom_call.1} parent=1 // pred_check
      %p54 = pneg %p53
    $region19: #{tpu_custom_call.1} parent=1 // pred_check_branch
      %56 = sbr.rel (%p54) target = $region21
    $region20: #{tpu_custom_call.1} parent=1 // pred_region
      %v57 = vlaneseq
      %vm58 = vcmp.ge.s32.totalorder %v57, 0
      %vm59 = vcmp.lt.s32.totalorder %v57, 256
      %vm60 = vmand %vm58, %vm59
      %61 = vst.msk [vmem:[#allocation7] sm:$0x3] %vm60, 0.0
      %62 = vst.msk [vmem:[#allocation7 + $0x2] sm:$0x3] %vm60, 0.0
    $region21: #{tpu_custom_call.1} parent=1 // pred_fallthru
      _
    %v63 = vlaneseq
    %v64 = vshrl.u32 %v63, 7
    %v65 = vld [vmem:[#allocation7] sm:$0x3]
    %v66 = vld [vmem:[#allocation2] sm:$0xff]
    %v67 = vld [vmem:[#allocation2 + $0x8] sm:$0xff]
    %v68 = vld [vmem:[#allocation5] sm:$0x3]
    %v69 = vrot.slane %v66, 4
    %v70 = vmax.f32 %v66, %v69
    %v71 = vrot.slane %v70, 2
    %v72 = vmax.f32 %v70, %v71
    %v73 = vrot.slane %v72, 1
    %v74 = vmax.f32 %v72, %v73
    %v75 = vrot.slane %v67, 4
    %v76 = vmax.f32 %v67, %v75
    %v77 = vrot.slane %v76, 2
    %v78 = vmax.f32 %v76, %v77
    %v79 = vrot.slane %v78, 1
    %v80 = vmax.f32 %v78, %v79
    %v81 = vsub.f32 %v66, %v74
    %v82 = vsub.f32 %v67, %v80
    %v83 = vmul.f32 %v81, 1.442695
    %v84 = vpow.pop %v83
    %v85 = vmul.f32 %v82, 1.442695
    %v86 = vpow.pop %v85
    %v87 = vrot.slane %v84, 4
    %v88 = vadd.f32 %v84, %v87
    %v89 = vrot.slane %v88, 2
    %v90 = vadd.f32 %v88, %v89
    %v91 = vrot.slane %v90, 1
    %v92 = vadd.f32 %v90, %v91
    %v93 = vrot.slane %v86, 4
    %v94 = vadd.f32 %v86, %v93
    %v95 = vrot.slane %v94, 2
    %v96 = vadd.f32 %v94, %v95
    %v97 = vrot.slane %v96, 1
    %v98 = vadd.f32 %v96, %v97
    %v99 = vlaneseq
    %v100 = vshrl.u32 %v99, 7
    %v101 = vsub.s32 0, %v100
    %v102 = vrot.slane %v68, %v101
    %v103 = vlaneseq
    %v104 = vshrl.u32 %v103, 7
    %v105 = vsub.s32 1, %v104
    %v106 = vrot.slane %v68, %v105
    %vm107 = vcmp.eq.s32.totalorder %v64, %v102
    %vm108 = vcmp.eq.s32.totalorder %v64, %v106
    %v109 = vsel %vm107, %v81, 0.0
    %v110 = vsel %vm108, %v82, 0.0
    %v111 = vrot.slane %v109, 4
    %v112 = vadd.f32 %v109, %v111
    %v113 = vrot.slane %v112, 2
    %v114 = vadd.f32 %v112, %v113
    %v115 = vrot.slane %v114, 1
    %v116 = vadd.f32 %v114, %v115
    %v117 = vrot.slane %v110, 4
    %v118 = vadd.f32 %v110, %v117
    %v119 = vrot.slane %v118, 2
    %v120 = vadd.f32 %v118, %v119
    %v121 = vrot.slane %v120, 1
    %v122 = vadd.f32 %v120, %v121
    %v123 = vlog2.pop %v92
    %v124 = vmul.f32 %v123, 0.6931472
    %v125 = vlog2.pop %v98
    %v126 = vmul.f32 %v125, 0.6931472
    %v127 = vsub.f32 %v124, %v116
    %v128 = vsub.f32 %v126, %v122
    %v131 = vcombine.low %v127, %v128
    %v133 = vunpack.c.l.s4 1966171168
    %v134 = vunpack.c.0.s8 %v133
    %v135 = vlaneseq
    %v136 = vshrl.u32 %v135, 7
    %v137 = vsub.s32 %v134, %v136
    %v138 = vrot.slane %v131, %v137
    %v140 = vunpack.c.l.s4 1966171168
    %v141 = vunpack.c.0.s8 %v140
    %v142 = vlaneseq
    %v143 = vshrl.u32 %v142, 7
    %v144 = vsub.s32 %v141, %v143
    %v145 = vrot.slane %v138, %v144
    %v147 = vadd.f32 %v65, %v145
    %v148 = vlaneseq
    %vm149 = vcmp.ge.s32.totalorder %v148, 0
    %vm150 = vcmp.lt.s32.totalorder %v148, 256
    %vm151 = vmand %vm149, %vm150
    %152 = vst.msk [vmem:[#allocation7] sm:$0x3] %vm151, %v147
    %s153 = scalar_lea.vmem [#allocation7], 2
    %v154 = vld [vmem:[%s153] sm:$0x3]
    %s155 = scalar_lea.vmem [#allocation2], 16
    %v156 = vld [vmem:[%s155] sm:$0xff]
    %v157 = vld [vmem:[%s155 + $0x8] sm:$0xff]
    %s158 = scalar_lea.vmem [#allocation5], 2
    %v159 = vld [vmem:[%s158] sm:$0x3]
    %v160 = vrot.slane %v156, 4
    %v161 = vmax.f32 %v156, %v160
    %v162 = vrot.slane %v161, 2
    %v163 = vmax.f32 %v161, %v162
    %v164 = vrot.slane %v163, 1
    %v165 = vmax.f32 %v163, %v164
    %v166 = vrot.slane %v157, 4
    %v167 = vmax.f32 %v157, %v166
    %v168 = vrot.slane %v167, 2
    %v169 = vmax.f32 %v167, %v168
    %v170 = vrot.slane %v169, 1
    %v171 = vmax.f32 %v169, %v170
    %v172 = vsub.f32 %v156, %v165
    %v173 = vsub.f32 %v157, %v171
    %v174 = vmul.f32 %v172, 1.442695
    %v175 = vpow.pop %v174
    %v176 = vmul.f32 %v173, 1.442695
    %v177 = vpow.pop %v176
    %v178 = vrot.slane %v175, 4
    %v179 = vadd.f32 %v175, %v178
    %v180 = vrot.slane %v179, 2
    %v181 = vadd.f32 %v179, %v180
    %v182 = vrot.slane %v181, 1
    %v183 = vadd.f32 %v181, %v182
    %v184 = vrot.slane %v177, 4
    %v185 = vadd.f32 %v177, %v184
    %v186 = vrot.slane %v185, 2
    %v187 = vadd.f32 %v185, %v186
    %v188 = vrot.slane %v187, 1
    %v189 = vadd.f32 %v187, %v188
    %v190 = vlaneseq
    %v191 = vshrl.u32 %v190, 7
    %v192 = vsub.s32 0, %v191
    %v193 = vrot.slane %v159, %v192
    %v194 = vlaneseq
    %v195 = vshrl.u32 %v194, 7
    %v196 = vsub.s32 1, %v195
    %v197 = vrot.slane %v159, %v196
    %vm198 = vcmp.eq.s32.totalorder %v64, %v193
    %vm199 = vcmp.eq.s32.totalorder %v64, %v197
    %v200 = vsel %vm198, %v172, 0.0
    %v201 = vsel %vm199, %v173, 0.0
    %v202 = vrot.slane %v200, 4
    %v203 = vadd.f32 %v200, %v202
    %v204 = vrot.slane %v203, 2
    %v205 = vadd.f32 %v203, %v204
    %v206 = vrot.slane %v205, 1
    %v207 = vadd.f32 %v205, %v206
    %v208 = vrot.slane %v201, 4
    %v209 = vadd.f32 %v201, %v208
    %v210 = vrot.slane %v209, 2
    %v211 = vadd.f32 %v209, %v210
    %v212 = vrot.slane %v211, 1
    %v213 = vadd.f32 %v211, %v212
    %v214 = vlog2.pop %v183
    %v215 = vmul.f32 %v214, 0.6931472
    %v216 = vlog2.pop %v189
    %v217 = vmul.f32 %v216, 0.6931472
    %v218 = vsub.f32 %v215, %v207
    %v219 = vsub.f32 %v217, %v213
    %v222 = vcombine.low %v218, %v219
    %v224 = vunpack.c.l.s4 1966171168
    %v225 = vunpack.c.0.s8 %v224
    %v226 = vlaneseq
    %v227 = vshrl.u32 %v226, 7
    %v228 = vsub.s32 %v225, %v227
    %v229 = vrot.slane %v222, %v228
    %v231 = vunpack.c.l.s4 1966171168
    %v232 = vunpack.c.0.s8 %v231
    %v233 = vlaneseq
    %v234 = vshrl.u32 %v233, 7
    %v235 = vsub.s32 %v232, %v234
    %v236 = vrot.slane %v229, %v235
    %v238 = vadd.f32 %v154, %v236
    %239 = vst.msk [vmem:[%s153] sm:$0x3] %vm151, %v238
    // Predicated region
    $region22: #{tpu_custom_call.1} parent=1 // pred_check
      _
    $region23: #{tpu_custom_call.1} parent=1 // pred_check_branch
      %241 = sbr.rel (0) target = $region25
    $region24: #{tpu_custom_call.1} parent=1 // pred_region
      %s242 = sadd.s32 0, 0
      %s244 = ssub.s32 64, 64
      %245 = vsyncadd [#allocation4], %s244
      %s246 = smul.addr %s242, 4
      %s247 = smul.addr %s246, 16
      %s248 = scalar_lea.hbm %s2, %s247
      %s249 = sshll.u32 [#allocation7], 4
      %s250 = int_to_ptr.vmem [resolvable:$true] %s249
      %255 = dma.vmem_to_hbm [thread:$0]  %s250, 64, %s248, [#allocation4], 32, 32, 2
    $region25: #{tpu_custom_call.1} parent=1 // pred_fallthru
      _
    // Predicated region
    $region26: #{tpu_custom_call.1} parent=1 // pred_check
      _
    $region27: #{tpu_custom_call.1} parent=1 // pred_check_branch
      %257 = sbr.rel (0) target = $region29
    $region28: #{tpu_custom_call.1} parent=1 // pred_region
      %258 = dma.done [#allocation4], 64
    $region29: #{tpu_custom_call.1} parent=1 // pred_fallthru
      _
    %259 = vsyncpa [#allocation3], 1
    %260 = vsyncpa [#allocation6], 1
    %261 = vsyncpa [#allocation4], 1

</llo_original>
